<compile_context>
chip_gen: v5e
topology: v5e:2x2
jax: 0.10.0
libtpu: 0.0.40
codegen_flags: <defaults>
</compile_context>

<pallas_src>
import functools

import jax
import jax.numpy as jnp
import numpy as np
from jax.experimental import pallas as pl
from jax.experimental.pallas import tpu as pltpu

_EPS = 1e-3  # matches nn.BatchNorm2d(nIn, eps=0.001)


def _round_up(a, b):
    return ((a + b - 1) // b) * b


def _vmem_limit_bytes():
    """Generation-aware scoped-VMEM limit (~3/4 of physical VMEM)."""
    cap = None
    try:
        cap = getattr(pltpu.get_tpu_info(), "vmem_capacity_bytes", None)
    except Exception:
        cap = None
    if not cap or cap <= 0:
        cap = 64 << 20  # conservative: assume the smallest (v7x) physical VMEM
    return int(min(cap * 3 // 4, 100 << 20))


def _plan_tiling(n, c, hw, in_isz, out_isz, block_budget):
    """Choose mode + block sizes.

    mode "fused":    grid over channel blocks only; each block holds all of
                     (N, H*W) for its channels, stats + normalize in one step.
    mode "two_pass": a channel slab does not fit VMEM; grid (c, pass, hw) with
                     VMEM scratch accumulators (pass 0 = stats, pass 1 =
                     normalize + write; x is read twice from HBM).
    """
    def blk_bytes(bc, bhw):
        # double-buffered input + output blocks plus ~3 block-sized f32
        # temporaries materialized inside the kernel body.
        return n * bc * bhw * (2 * in_isz + 2 * out_isz + 3 * 4)

    # Enough grid steps to hide DMA behind compute and to let a v7x megacore
    # shard the parallel channel axis across both TensorCores.
    total = n * c * hw * (in_isz + out_isz)
    if total >= (32 << 20):
        min_steps = 4
    elif total >= (4 << 20):
        min_steps = 2
    else:
        min_steps = 1

    # Channel-block candidates: full C (always layout-legal) plus multiples of
    # 8 (legal once C is padded up to a multiple of the block).
    cands = [c] + list(range(_round_up(c, 8) - 8, 0, -8))
    c8 = _round_up(c, 8)

    # ---- fused single-pass: whole (N, H*W) slab resident per channel block --
    fitting = [b for b in cands if blk_bytes(b, hw) <= block_budget]
    if fitting:
        with_steps = [b for b in fitting if -(-c // b) >= min_steps]
        pool = with_steps if with_steps else fitting
        low_pad = [b for b in pool if _round_up(c, b) <= c8]
        if low_pad:
            bc = max(low_pad)
        else:  # pragma: no cover - defensive
            bc = min(pool, key=lambda b: (_round_up(c, b), -b))
        c_pad = c if bc == c else _round_up(c, bc)
        return dict(mode="fused", bc=bc, c_pad=c_pad, bhw=hw, hw_pad=hw)

    # ---- two-pass fallback: block H*W too (lane-dense multiples of 128) -----
    hw_pad = hw if hw % 128 == 0 else _round_up(hw, 128)
    hw_cands = [d for d in range(hw_pad, 0, -128) if hw_pad % d == 0]
    best = None
    for b in cands:
        for d in hw_cands:
            if blk_bytes(b, d) <= block_budget:
                if best is None or b * d > best[0] * best[1]:
                    best = (b, d)
                break  # hw_cands descending: first fit is the largest
    if best is None:
        # TODO(synk): also block the batch axis when even an (N, 8, 128) tile
        # overflows VMEM; rely on the generous vmem_limit until then.
        best = (8 if c > 8 else c, min(128, hw_pad))
    bc, bhw = best
    c_pad = c if bc == c else _round_up(c, bc)
    return dict(mode="two_pass", bc=bc, c_pad=c_pad, bhw=bhw, hw_pad=hw_pad)


# ----------------------------- kernels --------------------------------------


def _bn_prelu_fused_kernel(x_ref, p_ref, o_ref, *, inv_n, compute_dtype):
    x = x_ref[...]                                           # (N, BC, HW)

    # One-pass statistics accumulated in f32.  var = E[x^2] - mean^2 avoids a
    # centered block-sized temp; slightly less robust than the centered form
    # when |mean| >> std, so it is clamped at 0 (fine for activation data).
    s = jnp.sum(jnp.sum(x, axis=2, keepdims=True, dtype=jnp.float32),
                axis=0, keepdims=True)                       # (1, BC, 1)
    ss = jnp.sum(jnp.sum(x * x, axis=2, keepdims=True, dtype=jnp.float32),
                 axis=0, keepdims=True)                      # (1, BC, 1)
    mean = s * inv_n
    var = jnp.maximum(ss * inv_n - mean * mean, 0.0)
    inv_std = jax.lax.rsqrt(var + _EPS)                      # EUP rsqrt

    pp = p_ref[...]                                          # (BC, 3)
    g = pp[:, 0:1][None]                                     # (1, BC, 1)
    b = pp[:, 1:2][None]
    scale32 = inv_std * g                                    # fold gamma in
    shift32 = b - mean * scale32
    scale = scale32.astype(compute_dtype)
    shift = shift32.astype(compute_dtype)
    a = pp[:, 2:3][None].astype(compute_dtype)

    y = x.astype(compute_dtype) * scale + shift
    o_ref[...] = jnp.where(y > 0, y, a * y).astype(o_ref.dtype)


def _bn_prelu_two_pass_kernel(x_ref, p_ref, o_ref, sum_ref, ssq_ref, *,
                              inv_n, compute_dtype):
    p = pl.program_id(1)
    h = pl.program_id(2)

    @pl.when((p == 0) & (h == 0))
    def _():
        sum_ref[...] = jnp.zeros_like(sum_ref)
        ssq_ref[...] = jnp.zeros_like(ssq_ref)

    x = x_ref[...]                                           # (N, BC, BHW)

    @pl.when(p == 0)                                         # stats pass
    def _():
        sum_ref[...] += jnp.sum(
            jnp.sum(x, axis=2, keepdims=True, dtype=jnp.float32), axis=0)
        ssq_ref[...] += jnp.sum(
            jnp.sum(x * x, axis=2, keepdims=True, dtype=jnp.float32), axis=0)

    @pl.when(p == 1)                                         # normalize pass
    def _():
        mean = sum_ref[...] * inv_n                          # (BC, 1)
        var = jnp.maximum(ssq_ref[...] * inv_n - mean * mean, 0.0)
        inv_std = jax.lax.rsqrt(var + _EPS)
        pp = p_ref[...]                                      # (BC, 3)
        scale32 = inv_std * pp[:, 0:1]
        shift32 = pp[:, 1:2] - mean * scale32
        scale = scale32[None].astype(compute_dtype)          # (1, BC, 1)
        shift = shift32[None].astype(compute_dtype)
        a = pp[:, 2:3][None].astype(compute_dtype)
        y = x.astype(compute_dtype) * scale + shift
        o_ref[...] = jnp.where(y > 0, y, a * y).astype(o_ref.dtype)


# --------------------------- pallas_call wrappers ----------------------------


def _call_fused(xr, params, *, n, c_pad, hw, bc, inv_n, compute_dtype,
                out_dtype, in_isz, out_isz, vmem_limit):
    kernel = functools.partial(_bn_prelu_fused_kernel, inv_n=inv_n,
                               compute_dtype=compute_dtype)
    return pl.pallas_call(
        kernel,
        out_shape=jax.ShapeDtypeStruct((n, c_pad, hw), out_dtype),
        grid=(c_pad // bc,),
        in_specs=[pl.BlockSpec((n, bc, hw), lambda i: (0, i, 0)),
                  pl.BlockSpec((bc, 3), lambda i: (i, 0))],
        out_specs=pl.BlockSpec((n, bc, hw), lambda i: (0, i, 0)),
        compiler_params=pltpu.CompilerParams(
            dimension_semantics=("parallel",),
            vmem_limit_bytes=vmem_limit),
        cost_estimate=pl.CostEstimate(
            flops=10 * n * c_pad * hw,
            transcendentals=c_pad,
            bytes_accessed=n * c_pad * hw * (in_isz + out_isz) + c_pad * 12),
    )(xr, params)


def _call_two_pass(xr, params, *, n, c_pad, hw_pad, bc, bhw, inv_n,
                   compute_dtype, out_dtype, in_isz, out_isz, vmem_limit):
    kernel = functools.partial(_bn_prelu_two_pass_kernel, inv_n=inv_n,
                               compute_dtype=compute_dtype)
    return pl.pallas_call(
        kernel,
        out_shape=jax.ShapeDtypeStruct((n, c_pad, hw_pad), out_dtype),
        grid=(c_pad // bc, 2, hw_pad // bhw),
        in_specs=[pl.BlockSpec((n, bc, bhw), lambda c, p, h: (0, c, h)),
                  pl.BlockSpec((bc, 3), lambda c, p, h: (c, 0))],
        # Pass 0 never writes: park the output window on block (., c, 0) so
        # nothing is flushed; pass 1 writes every (c, h) block exactly once.
        out_specs=pl.BlockSpec((n, bc, bhw), lambda c, p, h: (0, c, h * p)),
        scratch_shapes=[pltpu.VMEM((bc, 1), jnp.float32),
                        pltpu.VMEM((bc, 1), jnp.float32)],
        compiler_params=pltpu.CompilerParams(
            dimension_semantics=("parallel", "arbitrary", "arbitrary"),
            vmem_limit_bytes=vmem_limit),
        cost_estimate=pl.CostEstimate(
            flops=12 * n * c_pad * hw_pad,
            transcendentals=c_pad * (hw_pad // bhw),
            bytes_accessed=n * c_pad * hw_pad * (2 * in_isz + out_isz)
                           + c_pad * 12),
    )(xr, params)


@jax.jit
def bn_prelu(x, gamma, beta, alpha):
    """Pallas equivalent of CFPNet BNPReLU.forward (training-mode BN stats).

    x: (N, C, H, W); gamma/beta (BatchNorm affine), alpha (PReLU): (C,)."""
    N, C, H, W = x.shape
    HW = H * W
    in_isz = x.dtype.itemsize
    out_dtype = x.dtype
    out_isz = in_isz

    vmem_limit = _vmem_limit_bytes()
    plan = _plan_tiling(N, C, HW, in_isz, out_isz, int(vmem_limit * 0.8))
    bc, c_pad, bhw, hw_pad = plan["bc"], plan["c_pad"], plan["bhw"], plan["hw_pad"]

    # Lane-dense view: the last dim (H*W) maps to the 128-wide lane axis.
    xr = x.reshape(N, C, HW)
    params = jnp.stack([gamma.astype(jnp.float32),
                        beta.astype(jnp.float32),
                        alpha.astype(jnp.float32)], axis=-1)     # (C, 3)

    if c_pad > C or hw_pad > HW:
        # Zero padding keeps the statistics exact (inv_n uses the true count);
        # padded channels/lanes are sliced off below.
        xr = jnp.pad(xr, ((0, 0), (0, c_pad - C), (0, hw_pad - HW)))
        params = jnp.pad(params, ((0, c_pad - C), (0, 0)))

    inv_n = 1.0 / float(N * HW)                   # true element count/channel
    cdt = jnp.bfloat16 if x.dtype == jnp.bfloat16 else jnp.float32

    common = dict(n=N, c_pad=c_pad, bc=bc, inv_n=inv_n, compute_dtype=cdt,
                  out_dtype=out_dtype, in_isz=in_isz, out_isz=out_isz,
                  vmem_limit=vmem_limit)
    if plan["mode"] == "fused":
        out = _call_fused(xr, params, hw=hw_pad, **common)
    else:
        out = _call_two_pass(xr, params, hw_pad=hw_pad, bhw=bhw, **common)

    return out[:, :C, :HW].reshape(N, C, H, W)


def _reference_bn_prelu(x, gamma, beta, alpha, eps=_EPS):
    """Pure-JAX reference: training-mode BatchNorm2d (biased var) + PReLU."""
    mean = jnp.mean(x, axis=(0, 2, 3), keepdims=True)
    var = jnp.mean((x - mean) ** 2, axis=(0, 2, 3), keepdims=True)
    y = (x - mean) * jax.lax.rsqrt(var + eps)
    y = y * gamma[None, :, None, None] + beta[None, :, None, None]
    return jnp.where(y > 0, y, alpha[None, :, None, None] * y)


if __name__ == "__main__":
    key = jax.random.PRNGKey(0)
    kx, kg, kb, ka = jax.random.split(key, 4)
    N, C, H, W = 2, 4, 16, 16

    x = jax.random.normal(kx, (N, C, H, W), dtype=jnp.float32)
    gamma = 1.0 + 0.1 * jax.random.normal(kg, (C,), dtype=jnp.float32)
    beta = 0.1 * jax.random.normal(kb, (C,), dtype=jnp.float32)
    alpha = 0.25 + 0.05 * jax.random.normal(ka, (C,), dtype=jnp.float32)

    ref = _reference_bn_prelu(x, gamma, beta, alpha)

    # 1) main entry point (picks the fused single-pass path at this size).
    out = jax.block_until_ready(bn_prelu(x, gamma, beta, alpha))
    assert out.shape == (N, C, H, W), out.shape
    np.testing.assert_allclose(np.asarray(out), np.asarray(ref),
                               rtol=1e-5, atol=1e-5)

    # 2) exercise the large-activation fallback (two-pass stats + normalize)
    #    at the same small shape by forcing tiny HW blocks.
    xr = x.reshape(N, C, H * W)
    params = jnp.stack([gamma, beta, alpha], axis=-1).astype(jnp.float32)
    out2 = _call_two_pass(
        xr, params, n=N, c_pad=C, hw_pad=H * W, bc=C, bhw=128,
        inv_n=1.0 / float(N * H * W), compute_dtype=jnp.float32,
        out_dtype=x.dtype, in_isz=4, out_isz=4,
        vmem_limit=_vmem_limit_bytes())
    out2 = jax.block_until_ready(out2).reshape(N, C, H, W)
    np.testing.assert_allclose(np.asarray(out2), np.asarray(ref),
                               rtol=1e-5, atol=1e-5)

    print("KERNEL_OK")
</pallas_src>

<mosaic_0001>
module attributes {stable_mosaic.version = 11 : i64} {
  func.func @_bn_prelu_fused_kernel(%arg0: i32, %arg1: memref<2x4x256xf32, #tpu.memory_space<vmem>>, %arg2: memref<4x3xf32, #tpu.memory_space<vmem>>, %arg3: memref<2x4x256xf32, #tpu.memory_space<vmem>>) attributes {dimension_semantics = [#tpu.dimension_semantics<parallel>], iteration_bounds = array<i64: 1>, scalar_prefetch = 0 : i64, scratch_operands = 0 : i64, tpu.core_type = #tpu.core_type<tc>, window_params = [{transform_indices = @transform_0, window_bounds = array<i64: 2, 4, 256>}, {transform_indices = @transform_1, window_bounds = array<i64: 4, 3>}, {transform_indices = @transform_2, window_bounds = array<i64: 2, 4, 256>}]} {
    %c0 = arith.constant 0 : index
    %c0_0 = arith.constant 0 : index
    %c0_1 = arith.constant 0 : index
    %0 = vector.load %arg1[%c0, %c0_0, %c0_1] : memref<2x4x256xf32, #tpu.memory_space<vmem>>, vector<2x4x256xf32>
    %cst = arith.constant dense<0.000000e+00> : vector<2x4xf32>
    %1 = vector.multi_reduction <add>, %0, %cst [2] : vector<2x4x256xf32> to vector<2x4xf32>
    %2 = vector.shape_cast %1 : vector<2x4xf32> to vector<2x4x1xf32>
    %cst_2 = arith.constant dense<0.000000e+00> : vector<4x1xf32>
    %3 = vector.multi_reduction <add>, %2, %cst_2 [0] : vector<2x4x1xf32> to vector<4x1xf32>
    %4 = vector.shape_cast %3 : vector<4x1xf32> to vector<1x4x1xf32>
    %5 = arith.mulf %0, %0 : vector<2x4x256xf32>
    %cst_3 = arith.constant dense<0.000000e+00> : vector<2x4xf32>
    %6 = vector.multi_reduction <add>, %5, %cst_3 [2] : vector<2x4x256xf32> to vector<2x4xf32>
    %7 = vector.shape_cast %6 : vector<2x4xf32> to vector<2x4x1xf32>
    %cst_4 = arith.constant dense<0.000000e+00> : vector<4x1xf32>
    %8 = vector.multi_reduction <add>, %7, %cst_4 [0] : vector<2x4x1xf32> to vector<4x1xf32>
    %9 = vector.shape_cast %8 : vector<4x1xf32> to vector<1x4x1xf32>
    %cst_5 = arith.constant 0.001953125 : f32
    %10 = vector.broadcast %cst_5 : f32 to vector<1x4x1xf32>
    %11 = arith.mulf %4, %10 : vector<1x4x1xf32>
    %cst_6 = arith.constant 0.001953125 : f32
    %12 = vector.broadcast %cst_6 : f32 to vector<1x4x1xf32>
    %13 = arith.mulf %9, %12 : vector<1x4x1xf32>
    %14 = arith.mulf %11, %11 : vector<1x4x1xf32>
    %15 = arith.subf %13, %14 : vector<1x4x1xf32>
    %cst_7 = arith.constant 0.000000e+00 : f32
    %16 = vector.broadcast %cst_7 : f32 to vector<1x4x1xf32>
    %17 = arith.maximumf %15, %16 : vector<1x4x1xf32>
    %cst_8 = arith.constant 1.000000e-03 : f32
    %18 = vector.broadcast %cst_8 : f32 to vector<1x4x1xf32>
    %19 = arith.addf %17, %18 : vector<1x4x1xf32>
    %20 = math.rsqrt %19 : vector<1x4x1xf32>
    %c0_9 = arith.constant 0 : index
    %c0_10 = arith.constant 0 : index
    %21 = vector.load %arg2[%c0_9, %c0_10] : memref<4x3xf32, #tpu.memory_space<vmem>>, vector<4x3xf32>
    %22 = vector.extract_strided_slice %21 {offsets = [0, 0], sizes = [4, 1], strides = [1, 1]} : vector<4x3xf32> to vector<4x1xf32>
    %23 = vector.shape_cast %22 : vector<4x1xf32> to vector<1x4x1xf32>
    %24 = vector.extract_strided_slice %21 {offsets = [0, 1], sizes = [4, 1], strides = [1, 1]} : vector<4x3xf32> to vector<4x1xf32>
    %25 = vector.shape_cast %24 : vector<4x1xf32> to vector<1x4x1xf32>
    %26 = arith.mulf %20, %23 : vector<1x4x1xf32>
    %27 = arith.mulf %11, %26 : vector<1x4x1xf32>
    %28 = arith.subf %25, %27 : vector<1x4x1xf32>
    %29 = vector.extract_strided_slice %21 {offsets = [0, 2], sizes = [4, 1], strides = [1, 1]} : vector<4x3xf32> to vector<4x1xf32>
    %30 = vector.shape_cast %29 : vector<4x1xf32> to vector<1x4x1xf32>
    %31 = vector.broadcast %26 : vector<1x4x1xf32> to vector<2x4x256xf32>
    %32 = arith.mulf %0, %31 : vector<2x4x256xf32>
    %33 = vector.broadcast %28 : vector<1x4x1xf32> to vector<2x4x256xf32>
    %34 = arith.addf %32, %33 : vector<2x4x256xf32>
    %cst_11 = arith.constant 0.000000e+00 : f32
    %35 = vector.broadcast %cst_11 : f32 to vector<2x4x256xf32>
    %36 = arith.cmpf ogt, %34, %35 : vector<2x4x256xf32>
    %37 = vector.broadcast %30 : vector<1x4x1xf32> to vector<2x4x256xf32>
    %38 = arith.mulf %37, %34 : vector<2x4x256xf32>
    %39 = arith.select %36, %34, %38 : vector<2x4x256xi1>, vector<2x4x256xf32>
    %c0_12 = arith.constant 0 : index
    %c0_13 = arith.constant 0 : index
    %c0_14 = arith.constant 0 : index
    %40 = vector.load %arg3[%c0_12, %c0_13, %c0_14] : memref<2x4x256xf32, #tpu.memory_space<vmem>>, vector<2x4x256xf32>
    tpu.vector_store %arg3[%c0_12, %c0_13, %c0_14], %39 {strides = array<i32>} : memref<2x4x256xf32, #tpu.memory_space<vmem>>, vector<2x4x256xf32>,
    return
  }
  func.func @transform_0(%arg0: i32) -> (i32, i32, i32) {
    %c0_i32 = arith.constant 0 : i32
    %c0_i32_0 = arith.constant 0 : i32
    %c0_i32_1 = arith.constant 0 : i32
    return %c0_i32, %arg0, %c0_i32_0 : i32, i32, i32
  }
  func.func @transform_1(%arg0: i32) -> (i32, i32) {
    %c0_i32 = arith.constant 0 : i32
    %c0_i32_0 = arith.constant 0 : i32
    return %arg0, %c0_i32 : i32, i32
  }
  func.func @transform_2(%arg0: i32) -> (i32, i32, i32) {
    %c0_i32 = arith.constant 0 : i32
    %c0_i32_0 = arith.constant 0 : i32
    %c0_i32_1 = arith.constant 0 : i32
    return %c0_i32, %arg0, %c0_i32_0 : i32, i32, i32
  }
}

</mosaic_0001>

<llo_original>
// kernel: bn_prelu.1
$region0: #{bn_prelu.1}
  #allocation0 [shape = 'u32[]', space=smem, size = 0x4, offset = 0x4, fixed_abs, tag = 'smem constant byte address 0x4 - core index']
  #allocation1 [shape = 'u32[72,128]{1,0:T(1,128)}', space=vmem, size = 0x9000, scoped, tag = 'internal scratch']
  %s0 = inlined_call_operand.vmem [shape: f32[2,4,256], index: 0, kind: input, shape index: {}]
  %s1 = inlined_call_operand.vmem [shape: f32[4,3], index: 1, kind: input, shape index: {}]
  %s2 = inlined_call_operand.vmem [shape: f32[2,4,256], index: 2, kind: output, shape index: {}]
  %s3 = sld [smem:[#allocation0]]
  $region18: #{bn_prelu.1} parent=0
    _
  %s5 = ssub.s32 1, %s3
  %s6 = scalar_select 0, %s5, %s3
  // Predicated region
  $region2: #{bn_prelu.1} parent=0 // pred_check
    _
  $region3: #{bn_prelu.1} parent=0 // pred_check_branch
    %8 = sbr.rel (0) target = $region5
  $region4: #{bn_prelu.1} parent=0 // pred_region
    _
  $region5: #{bn_prelu.1} parent=0 // pred_fallthru
    _
  // Predicated region
  $region6: #{bn_prelu.1} parent=0 // pred_check
    _
  $region7: #{bn_prelu.1} parent=0 // pred_check_branch
    %10 = sbr.rel (0) target = $region9
  $region8: #{bn_prelu.1} parent=0 // pred_region
    _
  $region9: #{bn_prelu.1} parent=0 // pred_fallthru
    _
  %v11 = vld [vmem:[%s0] sm:$0xff]
  %v12 = vld [vmem:[%s0 + $0x8] sm:$0xff]
  %15 = vst [vmem:[#allocation1] ss:$2 sm:$0xff] %v11
  %v16 = vld.sshfl [vmem:[#allocation1] sm:$0xff pattern:$0x75316420]
  %v17 = vld.sshfl [vmem:[#allocation1 + $0x8] sm:$0xff pattern:$0x75316420]
  %s18 = scalar_lea.vmem [#allocation1], 16
  %19 = vst [vmem:[%s18] ss:$2 sm:$0xff] %v12
  %v20 = vld.sshfl [vmem:[#allocation1 + $0x10] sm:$0xff pattern:$0x75316420]
  %v21 = vld.sshfl [vmem:[#allocation1 + $0x18] sm:$0xff pattern:$0x75316420]
  %vm26 = vcmask 1043456
  %v27 = vsel %vm26, %v16, 0.0
  %v28 = vsel %vm26, %v17, 0.0
  %v29 = vadd.f32 %v27, %v28
  %30 = vadd.xlane.f32.xlu0 %v29
  %v31 = vpop.xlane.xlu0 %30
  %v32 = vsel %vm26, %v20, 0.0
  %v33 = vsel %vm26, %v21, 0.0
  %v34 = vadd.f32 %v32, %v33
  %35 = vadd.xlane.f32.xlu0 %v34
  %v36 = vpop.xlane.xlu0 %35
  %v37 = vsel %vm26, %v31, 0.0
  %v38 = vsel %vm26, %v36, 0.0
  %v39 = vadd.f32 %v37, %v38
  %v40 = vmul.f32 %v11, %v11
  %v41 = vmul.f32 %v12, %v12
  %44 = vst [vmem:[#allocation1] ss:$2 sm:$0xff] %v40
  %v45 = vld.sshfl [vmem:[#allocation1] sm:$0xff pattern:$0x75316420]
  %v46 = vld.sshfl [vmem:[#allocation1 + $0x8] sm:$0xff pattern:$0x75316420]
  %s47 = scalar_lea.vmem [#allocation1], 16
  %48 = vst [vmem:[%s47] ss:$2 sm:$0xff] %v41
  %v49 = vld.sshfl [vmem:[#allocation1 + $0x10] sm:$0xff pattern:$0x75316420]
  %v50 = vld.sshfl [vmem:[#allocation1 + $0x18] sm:$0xff pattern:$0x75316420]
  %v55 = vsel %vm26, %v45, 0.0
  %v56 = vsel %vm26, %v46, 0.0
  %v57 = vadd.f32 %v55, %v56
  %58 = vadd.xlane.f32.xlu0 %v57
  %v59 = vpop.xlane.xlu0 %58
  %v60 = vsel %vm26, %v49, 0.0
  %v61 = vsel %vm26, %v50, 0.0
  %v62 = vadd.f32 %v60, %v61
  %63 = vadd.xlane.f32.xlu0 %v62
  %v64 = vpop.xlane.xlu0 %63
  %v65 = vsel %vm26, %v59, 0.0
  %v66 = vsel %vm26, %v64, 0.0
  %v67 = vadd.f32 %v65, %v66
  %v68 = vmul.f32 %v39, 0.001953125
  %v69 = vmul.f32 %v67, 0.001953125
  %v70 = vmul.f32 %v68, %v68
  %v71 = vsub.f32 %v69, %v70
  %v72 = vmax.f32 %v71, 0.0
  %v73 = vadd.f32 %v72, 0.001
  %v74 = vrsqrt.pop %v73
  %v75 = vmul.f32 %v74, %v73
  %v76 = vmul.f32 %v75, %v74
  %v77 = vmul.f32 0.5, %v76
  %v78 = vsub.f32 1.5, %v77
  %v79 = vmul.f32 %v74, %v78
  %vm80 = vweird.f32 %v73
  %vm81 = vweird.f32 %v74
  %vm82 = vmor %vm80, %vm81
  %v83 = vsel %vm82, %v74, %v79
  %v84 = vld [vmem:[%s1] sm:$0xf]
  %v85 = vmul.f32 %v83, %v84
  %v86 = vmul.f32 %v68, %v85
  %88 = vrot.lane.b32.xlu0 %v86, 1
  %v89 = vpop.permute.xlu0 %88
  %v91 = vsub.f32 %v84, %v89
  %93 = vset.pattern.permute.xlu0 0
  %94 = vperm.xlu0 %93, %v85
  %v95 = vpop.permute.xlu0 %94
  %v97 = vunpack.c.l.s4 839922192
  %v98 = vunpack.c.0.s8 %v97
  %v99 = vperm.slane %v95, %v98
  %v101 = vmul.f32 %v11, %v99
  %v102 = vmul.f32 %v12, %v99
  %104 = vset.pattern.permute.xlu0 1
  %105 = vperm.xlu0 %104, %v91
  %v106 = vpop.permute.xlu0 %105
  %v108 = vunpack.c.l.s4 839922192
  %v109 = vunpack.c.0.s8 %v108
  %v110 = vperm.slane %v106, %v109
  %v112 = vadd.f32 %v101, %v110
  %v113 = vadd.f32 %v102, %v110
  %vm114 = vcmp.gt.f32.partialorder %v112, 0.0
  %vm115 = vcmp.gt.f32.partialorder %v113, 0.0
  %117 = vset.pattern.permute.xlu0 2
  %118 = vperm.xlu0 %117, %v84
  %v119 = vpop.permute.xlu0 %118
  %123 = vst [vmem:[#allocation1] ss:$2 sm:$0xff] %v112
  %v124 = vld.sshfl [vmem:[#allocation1] sm:$0xff pattern:$0x75316420]
  %v125 = vld.sshfl [vmem:[#allocation1 + $0x8] sm:$0xff pattern:$0x75316420]
  %s126 = scalar_lea.vmem [#allocation1], 16
  %127 = vst [vmem:[%s126] ss:$2 sm:$0xff] %v113
  %v128 = vld.sshfl [vmem:[#allocation1 + $0x10] sm:$0xff pattern:$0x75316420]
  %v129 = vld.sshfl [vmem:[#allocation1 + $0x18] sm:$0xff pattern:$0x75316420]
  %v134 = vmul.f32 %v119, %v124
  %v135 = vmul.f32 %v119, %v125
  %v136 = vmul.f32 %v119, %v128
  %v137 = vmul.f32 %v119, %v129
  %v142 = vrot.slane %v135, 4
  %v143 = vrot.slane %v137, 4
  %v144 = vsel %vm26, %v134, %v142
  %v145 = vsel %vm26, %v136, %v143
  %v148 = vsel %vm114, %v112, %v144
  %v149 = vsel %vm115, %v113, %v145
  %150 = vst [vmem:[%s2] sm:$0xff] %v148
  %151 = vst [vmem:[%s2 + $0x8] sm:$0xff] %v149
  // Predicated region
  $region10: #{bn_prelu.1} parent=0 // pred_check
    _
  $region11: #{bn_prelu.1} parent=0 // pred_check_branch
    %153 = sbr.rel (0) target = $region13
  $region12: #{bn_prelu.1} parent=0 // pred_region
    _
  $region13: #{bn_prelu.1} parent=0 // pred_fallthru
    _
  // Predicated region
  $region14: #{bn_prelu.1} parent=0 // pred_check
    _
  $region15: #{bn_prelu.1} parent=0 // pred_check_branch
    %155 = sbr.rel (0) target = $region17
  $region16: #{bn_prelu.1} parent=0 // pred_region
    _
  $region17: #{bn_prelu.1} parent=0 // pred_fallthru
    _

</llo_original>
